<compile_context>
chip_gen: v5e
topology: v5e:2x2
jax: 0.10.0
libtpu: 0.0.40
codegen_flags: <defaults>
</compile_context>

<pallas_src>
import math
import functools

import jax
import jax.numpy as jnp
from jax.experimental import pallas as pl
from jax.experimental.pallas import tpu as pltpu

# -------------------- SphereFace hyper-parameters (m = 4) --------------------
M_MARGIN = 4
BASE = 1000.0
GAMMA = 0.12
POWER = 1
LAMBDA_MIN = 5.0
PI_CONST = 3.14159265  # the exact constant used in the PyTorch code
EPS = 1e-12            # F.normalize default eps

# k = floor(m*theta/pi) for m = 4 is determined by comparing cos_theta against
# cos(k*PI_CONST/4), k = 1, 2, 3  (theta = acos(cos_theta) is decreasing).
_T1 = math.cos(1.0 * PI_CONST / 4.0)   #  ~0.70710678
_T2 = math.cos(2.0 * PI_CONST / 4.0)   #  ~+1.8e-9
_T3 = math.cos(3.0 * PI_CONST / 4.0)   # ~-0.70710678


def _sphereface_kernel(use_bf16_matmul,
                       lamb_ref, x_ref, w_ref, label_ref, out_ref, inv_w_ref):
    # lamb_ref : (1, 1)  f32 in SMEM, holds 1/(1+lambda)
    # x_ref    : (TB, D) f32 tile (streams over the inner B axis)
    # w_ref    : (TC, D) f32 tile (resident across the inner B axis)
    # label_ref: (TB, 1) int32 tile
    # out_ref  : (TB, TC) f32 tile
    # inv_w_ref: (TC, 1) f32 VMEM scratch, 1/max(||w||, eps) per class row
    j = pl.program_id(1)  # inner axis: B tiles

    # Weight-row norms are valid for every B tile of this weight tile; compute
    # them once per weight tile (first inner step) and carry them in scratch.
    @pl.when(j == 0)
    def _():
        w = w_ref[...]
        w_sumsq = jnp.sum(w * w, axis=1, keepdims=True)              # (TC, 1)
        inv_w_ref[...] = jax.lax.rsqrt(jnp.maximum(w_sumsq, EPS * EPS))

    inv_one_plus_lamb = lamb_ref[0, 0]

    x = x_ref[...]
    w = w_ref[...]
    labels = label_ref[...]                                          # (TB, 1)

    # Row norms of x; normalization is folded into the matmul output instead of
    # rescaling the full (TB, D) tile before the MXU.
    x_sumsq = jnp.sum(x * x, axis=1, keepdims=True)                  # (TB, 1)
    x_norm = jnp.sqrt(x_sumsq)                                       # ||x|| (no eps), final scale
    inv_x = jax.lax.rsqrt(jnp.maximum(x_sumsq, EPS * EPS))           # 1/max(||x||, eps)
    inv_w = inv_w_ref[...]                                           # (TC, 1)

    # Raw dot product on the MXU, contracting the last (lane) dims directly
    # (no materialized transpose of the weight tile).
    if use_bf16_matmul:
        # TODO(synk): bf16 matmul trades ~1e-3 cos_theta precision for ~2x MXU
        # throughput / half the weight DMA bytes (useful on v5e); off by default.
        xm = x.astype(jnp.bfloat16)
        wm = w.astype(jnp.bfloat16)
    else:
        xm, wm = x, w
    raw = jax.lax.dot_general(
        xm, wm,
        dimension_numbers=(((1,), (1,)), ((), ())),
        preferred_element_type=jnp.float32,
    )                                                                # (TB, TC)

    cos_theta = jnp.clip(raw * inv_x * inv_w.T, -1.0, 1.0)

    # cos(m*theta), m = 4: Chebyshev 8x^4 - 8x^2 + 1
    c2 = cos_theta * cos_theta
    cos_m_theta = 8.0 * c2 * c2 - 8.0 * c2 + 1.0

    # k = floor(m*theta/pi) and (-1)^k via three compares (no acos/floor).
    b1 = cos_theta < _T1
    b2 = cos_theta < _T2
    b3 = cos_theta < _T3
    k = (b1.astype(jnp.float32) + b2.astype(jnp.float32) + b3.astype(jnp.float32))
    odd = jnp.logical_xor(jnp.logical_xor(b1, b2), b3)
    sign = jnp.where(odd, -1.0, 1.0)
    phi_theta = sign * cos_m_theta - 2.0 * k

    # One-hot scatter via iota compare, offset by this block's class offset
    # (class/C tiles run on grid axis 0).
    TB, TC = cos_theta.shape
    col0 = pl.program_id(0) * TC
    col_ids = jax.lax.broadcasted_iota(jnp.int32, (TB, TC), 1) + col0
    one_hot = (col_ids == labels).astype(jnp.float32)

    out = one_hot * (phi_theta - cos_theta) * inv_one_plus_lamb + cos_theta
    out_ref[...] = (out * x_norm).astype(out_ref.dtype)


def _round_up(n, m):
    return ((n + m - 1) // m) * m


def sphereface_forward(x, weight, label, iter_count=1,
                       tb_max=256, tc_max=1024, use_bf16_matmul=False):
    """x: (B, D) f32, weight: (C, D) f32, label: (B,) int32. Returns (B, C) f32.

    Tile sizing: D stays un-tiled (contraction dim).  With TB=256, TC=1024,
    D=512 the working set is ~7 MiB (double-buffered), safe on v5e/v6e/v7x
    default scoped-VMEM limits.  Raise tc_max on v6e/v5e if D is small.
    """
    B, D = x.shape
    C, D2 = weight.shape
    assert D == D2

    lamb = max(LAMBDA_MIN, BASE * (1.0 + GAMMA * iter_count) ** (-POWER))
    inv_lamb = jnp.full((1, 1), 1.0 / (1.0 + lamb), dtype=jnp.float32)

    # Tile sizes: TB multiple of 8, TC multiple of 128 (lane-dense stores).
    TB = min(tb_max, _round_up(B, 8))
    TC = min(tc_max, _round_up(C, 128))
    B_pad = _round_up(B, TB)
    C_pad = _round_up(C, TC)

    x_p = jnp.pad(x, ((0, B_pad - B), (0, 0))) if B_pad != B else x
    w_p = jnp.pad(weight, ((0, C_pad - C), (0, 0))) if C_pad != C else weight
    label2d = label.reshape(B, 1).astype(jnp.int32)
    if B_pad != B:
        label2d = jnp.pad(label2d, ((0, B_pad - B), (0, 0)))

    # Outer axis: class (weight) tiles -> each weight tile DMA'd from HBM once.
    # Inner axis: batch tiles -> small x tile streams / is re-read per C tile.
    grid = (C_pad // TC, B_pad // TB)

    kernel = functools.partial(_sphereface_kernel, use_bf16_matmul)

    out = pl.pallas_call(
        kernel,
        out_shape=jax.ShapeDtypeStruct((B_pad, C_pad), jnp.float32),
        grid=grid,
        in_specs=[
            pl.BlockSpec(memory_space=pltpu.MemorySpace.SMEM),      # 1/(1+lamb)
            pl.BlockSpec((TB, D), lambda i, j: (j, 0)),             # x tile streams over B
            pl.BlockSpec((TC, D), lambda i, j: (i, 0)),             # weight tile (j-invariant)
            pl.BlockSpec((TB, 1), lambda i, j: (j, 0)),             # labels
        ],
        out_specs=pl.BlockSpec((TB, TC), lambda i, j: (j, i)),
        scratch_shapes=[pltpu.VMEM((TC, 1), jnp.float32)],          # 1/||w|| per class
        compiler_params=pltpu.CompilerParams(
            # Inner B axis carries the weight-norm scratch -> "arbitrary";
            # outer C axis is independent -> "parallel" (megacore sharding).
            dimension_semantics=("parallel", "arbitrary")),
    )(inv_lamb, x_p, w_p, label2d)

    return out[:B, :C]


def _reference(x, weight, label, iter_count=1):
    """Pure-JAX reference mirroring the PyTorch forward (device_id=None path)."""
    lamb = max(LAMBDA_MIN, BASE * (1.0 + GAMMA * iter_count) ** (-POWER))
    xn = x / jnp.maximum(jnp.linalg.norm(x, axis=1, keepdims=True), EPS)
    wn = weight / jnp.maximum(jnp.linalg.norm(weight, axis=1, keepdims=True), EPS)
    cos_theta = jnp.clip(xn @ wn.T, -1.0, 1.0)
    cos_m_theta = 8.0 * cos_theta ** 4 - 8.0 * cos_theta ** 2 + 1.0
    theta = jnp.arccos(cos_theta)
    k = jnp.floor(M_MARGIN * theta / PI_CONST)
    phi_theta = ((-1.0) ** k) * cos_m_theta - 2.0 * k
    norm_feat = jnp.linalg.norm(x, axis=1, keepdims=True)
    one_hot = jax.nn.one_hot(label, cos_theta.shape[1], dtype=jnp.float32)
    out = one_hot * (phi_theta - cos_theta) / (1.0 + lamb) + cos_theta
    return out * norm_feat


if __name__ == "__main__":
    key = jax.random.PRNGKey(0)

    # ---- Case 1: small, deterministic (B=8, D=32, C=16), single block ----
    B, D, C = 8, 32, 16
    kx, kw, kl, key = jax.random.split(key, 4)
    x = jax.random.normal(kx, (B, D), dtype=jnp.float32)
    bound = math.sqrt(6.0 / (D + C))       # xavier_uniform_ for (C, D) weight
    weight = jax.random.uniform(kw, (C, D), dtype=jnp.float32,
                                minval=-bound, maxval=bound)
    label = jax.random.randint(kl, (B,), 0, C, dtype=jnp.int32)

    out = jax.block_until_ready(sphereface_forward(x, weight, label, iter_count=1))
    ref = _reference(x, weight, label, iter_count=1)
    assert out.shape == (B, C)
    assert jnp.allclose(out, ref, atol=1e-4, rtol=1e-4), (
        f"case1 max abs diff {jnp.max(jnp.abs(out - ref))}")

    # ---- Case 2: non-aligned C / multi-block grid on BOTH axes (padding,
    #      class offsets, weight-norm scratch carried across inner B tiles) ----
    B2, D2, C2 = 16, 64, 200
    kx2, kw2, kl2, key = jax.random.split(key, 4)
    x2 = jax.random.normal(kx2, (B2, D2), dtype=jnp.float32)
    bound2 = math.sqrt(6.0 / (D2 + C2))
    w2 = jax.random.uniform(kw2, (C2, D2), dtype=jnp.float32,
                            minval=-bound2, maxval=bound2)
    l2 = jax.random.randint(kl2, (B2,), 0, C2, dtype=jnp.int32)

    out2 = jax.block_until_ready(
        sphereface_forward(x2, w2, l2, iter_count=3, tb_max=8, tc_max=128))
    ref2 = _reference(x2, w2, l2, iter_count=3)
    assert out2.shape == (B2, C2)
    assert jnp.allclose(out2, ref2, atol=1e-4, rtol=1e-4), (
        f"case2 max abs diff {jnp.max(jnp.abs(out2 - ref2))}")

    print("KERNEL_OK")
</pallas_src>

<mosaic_0001>
module attributes {stable_mosaic.version = 11 : i64} {
  func.func @_sphereface_kernel(%arg0: i32, %arg1: i32, %arg2: memref<1x1xf32, #tpu.memory_space<smem>>, %arg3: memref<8x32xf32, #tpu.memory_space<vmem>>, %arg4: memref<128x32xf32, #tpu.memory_space<vmem>>, %arg5: memref<8x1xi32, #tpu.memory_space<vmem>>, %arg6: memref<8x128xf32, #tpu.memory_space<vmem>>, %arg7: memref<128x1xf32, #tpu.memory_space<vmem>>) attributes {dimension_semantics = [#tpu.dimension_semantics<parallel>, #tpu.dimension_semantics<arbitrary>], iteration_bounds = array<i64: 1, 1>, scalar_prefetch = 0 : i64, scratch_operands = 1 : i64, tpu.core_type = #tpu.core_type<tc>, window_params = [{transform_indices = @transform_0, window_bounds = array<i64: 1, 1>}, {transform_indices = @transform_1, window_bounds = array<i64: 8, 32>}, {transform_indices = @transform_2, window_bounds = array<i64: 128, 32>}, {transform_indices = @transform_3, window_bounds = array<i64: 8, 1>}, {transform_indices = @transform_4, window_bounds = array<i64: 8, 128>}]} {
    %c0_i32 = arith.constant 0 : i32
    %0 = arith.cmpi eq, %arg1, %c0_i32 : i32
    %1 = arith.extui %0 : i1 to i32
    %c0_i32_0 = arith.constant 0 : i32
    %2 = arith.cmpi ne, %1, %c0_i32_0 : i32
    scf.if %2 {
      %c0_25 = arith.constant 0 : index
      %c0_26 = arith.constant 0 : index
      %73 = vector.load %arg4[%c0_25, %c0_26] : memref<128x32xf32, #tpu.memory_space<vmem>>, vector<128x32xf32>
      %74 = arith.mulf %73, %73 : vector<128x32xf32>
      %cst_27 = arith.constant dense<0.000000e+00> : vector<128xf32>
      %75 = vector.multi_reduction <add>, %74, %cst_27 [1] : vector<128x32xf32> to vector<128xf32>
      %76 = vector.shape_cast %75 : vector<128xf32> to vector<128x1xf32>
      %cst_28 = arith.constant 1.000000e-24 : f32
      %77 = vector.broadcast %cst_28 : f32 to vector<128x1xf32>
      %78 = arith.maximumf %76, %77 : vector<128x1xf32>
      %79 = math.rsqrt %78 : vector<128x1xf32>
      %c0_29 = arith.constant 0 : index
      %c0_30 = arith.constant 0 : index
      %80 = vector.load %arg7[%c0_29, %c0_30] : memref<128x1xf32, #tpu.memory_space<vmem>>, vector<128x1xf32>
      tpu.vector_store %arg7[%c0_29, %c0_30], %79 {strides = array<i32>} : memref<128x1xf32, #tpu.memory_space<vmem>>, vector<128x1xf32>,
    } else {
    }
    %c0 = arith.constant 0 : index
    %c0_1 = arith.constant 0 : index
    %3 = memref.load %arg2[%c0, %c0_1] : memref<1x1xf32, #tpu.memory_space<smem>>
    %c0_2 = arith.constant 0 : index
    %c0_3 = arith.constant 0 : index
    %4 = vector.load %arg3[%c0_2, %c0_3] : memref<8x32xf32, #tpu.memory_space<vmem>>, vector<8x32xf32>
    %c0_4 = arith.constant 0 : index
    %c0_5 = arith.constant 0 : index
    %5 = vector.load %arg4[%c0_4, %c0_5] : memref<128x32xf32, #tpu.memory_space<vmem>>, vector<128x32xf32>
    %c0_6 = arith.constant 0 : index
    %c0_7 = arith.constant 0 : index
    %6 = vector.load %arg5[%c0_6, %c0_7] : memref<8x1xi32, #tpu.memory_space<vmem>>, vector<8x1xi32>
    %7 = arith.mulf %4, %4 : vector<8x32xf32>
    %cst = arith.constant dense<0.000000e+00> : vector<8xf32>
    %8 = vector.multi_reduction <add>, %7, %cst [1] : vector<8x32xf32> to vector<8xf32>
    %9 = vector.shape_cast %8 : vector<8xf32> to vector<8x1xf32>
    %10 = math.sqrt %9 : vector<8x1xf32>
    %cst_8 = arith.constant 1.000000e-24 : f32
    %11 = vector.broadcast %cst_8 : f32 to vector<8x1xf32>
    %12 = arith.maximumf %9, %11 : vector<8x1xf32>
    %13 = math.rsqrt %12 : vector<8x1xf32>
    %c0_9 = arith.constant 0 : index
    %c0_10 = arith.constant 0 : index
    %14 = vector.load %arg7[%c0_9, %c0_10] : memref<128x1xf32, #tpu.memory_space<vmem>>, vector<128x1xf32>
    %cst_11 = arith.constant dense<0.000000e+00> : vector<8x128xf32>
    %15 = tpu.matmul %4, %5, %cst_11 {dimension_numbers = #tpu.dot_dimension_numbers<[1], [1], [0], [0], [0, 0, 1, 0], [], []>} : vector<8x32xf32>, vector<128x32xf32>, vector<8x128xf32> -> vector<8x128xf32>
    %16 = vector.broadcast %13 : vector<8x1xf32> to vector<8x128xf32>
    %17 = arith.mulf %15, %16 : vector<8x128xf32>
    %18 = tpu.transpose %14, [1, 0] : vector<128x1xf32> -> vector<1x128xf32>
    %19 = vector.broadcast %18 : vector<1x128xf32> to vector<8x128xf32>
    %20 = arith.mulf %17, %19 : vector<8x128xf32>
    %cst_12 = arith.constant -1.000000e+00 : f32
    %cst_13 = arith.constant 1.000000e+00 : f32
    %21 = vector.broadcast %cst_12 : f32 to vector<8x128xf32>
    %22 = arith.maximumf %21, %20 : vector<8x128xf32>
    %23 = vector.broadcast %cst_13 : f32 to vector<8x128xf32>
    %24 = arith.minimumf %23, %22 : vector<8x128xf32>
    %25 = arith.mulf %24, %24 : vector<8x128xf32>
    %cst_14 = arith.constant 8.000000e+00 : f32
    %26 = vector.broadcast %cst_14 : f32 to vector<8x128xf32>
    %27 = arith.mulf %26, %25 : vector<8x128xf32>
    %28 = arith.mulf %27, %25 : vector<8x128xf32>
    %cst_15 = arith.constant 8.000000e+00 : f32
    %29 = vector.broadcast %cst_15 : f32 to vector<8x128xf32>
    %30 = arith.mulf %29, %25 : vector<8x128xf32>
    %31 = arith.subf %28, %30 : vector<8x128xf32>
    %cst_16 = arith.constant 1.000000e+00 : f32
    %32 = vector.broadcast %cst_16 : f32 to vector<8x128xf32>
    %33 = arith.addf %31, %32 : vector<8x128xf32>
    %cst_17 = arith.constant 0.707106769 : f32
    %34 = vector.broadcast %cst_17 : f32 to vector<8x128xf32>
    %35 = arith.cmpf olt, %24, %34 : vector<8x128xf32>
    %cst_18 = arith.constant 1.79489656E-9 : f32
    %36 = vector.broadcast %cst_18 : f32 to vector<8x128xf32>
    %37 = arith.cmpf olt, %24, %36 : vector<8x128xf32>
    %cst_19 = arith.constant -0.707106769 : f32
    %38 = vector.broadcast %cst_19 : f32 to vector<8x128xf32>
    %39 = arith.cmpf olt, %24, %38 : vector<8x128xf32>
    %40 = arith.extui %35 : vector<8x128xi1> to vector<8x128xi32>
    %41 = arith.sitofp %40 : vector<8x128xi32> to vector<8x128xf32>
    %42 = arith.extui %37 : vector<8x128xi1> to vector<8x128xi32>
    %43 = arith.sitofp %42 : vector<8x128xi32> to vector<8x128xf32>
    %44 = arith.addf %41, %43 : vector<8x128xf32>
    %45 = arith.extui %39 : vector<8x128xi1> to vector<8x128xi32>
    %46 = arith.sitofp %45 : vector<8x128xi32> to vector<8x128xf32>
    %47 = arith.addf %44, %46 : vector<8x128xf32>
    %48 = arith.xori %35, %37 : vector<8x128xi1>
    %49 = arith.xori %48, %39 : vector<8x128xi1>
    %cst_20 = arith.constant -1.000000e+00 : f32
    %cst_21 = arith.constant 1.000000e+00 : f32
    %50 = vector.broadcast %cst_20 : f32 to vector<8x128xf32>
    %51 = vector.broadcast %cst_21 : f32 to vector<8x128xf32>
    %52 = arith.select %49, %50, %51 : vector<8x128xi1>, vector<8x128xf32>
    %53 = arith.mulf %52, %33 : vector<8x128xf32>
    %cst_22 = arith.constant 2.000000e+00 : f32
    %54 = vector.broadcast %cst_22 : f32 to vector<8x128xf32>
    %55 = arith.mulf %54, %47 : vector<8x128xf32>
    %56 = arith.subf %53, %55 : vector<8x128xf32>
    %c128_i32 = arith.constant 128 : i32
    %57 = arith.muli %arg0, %c128_i32 : i32
    %58 = tpu.iota {dimensions = array<i32: 1>} : vector<8x128xi32>
    %59 = vector.broadcast %57 : i32 to vector<8x128xi32>
    %60 = arith.addi %58, %59 : vector<8x128xi32>
    %61 = vector.broadcast %6 : vector<8x1xi32> to vector<8x128xi32>
    %62 = arith.cmpi eq, %60, %61 : vector<8x128xi32>
    %63 = arith.extui %62 : vector<8x128xi1> to vector<8x128xi32>
    %64 = arith.sitofp %63 : vector<8x128xi32> to vector<8x128xf32>
    %65 = arith.subf %56, %24 : vector<8x128xf32>
    %66 = arith.mulf %64, %65 : vector<8x128xf32>
    %67 = vector.broadcast %3 : f32 to vector<8x128xf32>
    %68 = arith.mulf %66, %67 : vector<8x128xf32>
    %69 = arith.addf %68, %24 : vector<8x128xf32>
    %70 = vector.broadcast %10 : vector<8x1xf32> to vector<8x128xf32>
    %71 = arith.mulf %69, %70 : vector<8x128xf32>
    %c0_23 = arith.constant 0 : index
    %c0_24 = arith.constant 0 : index
    %72 = vector.load %arg6[%c0_23, %c0_24] : memref<8x128xf32, #tpu.memory_space<vmem>>, vector<8x128xf32>
    tpu.vector_store %arg6[%c0_23, %c0_24], %71 {strides = array<i32>} : memref<8x128xf32, #tpu.memory_space<vmem>>, vector<8x128xf32>,
    return
  }
  func.func @transform_0(%arg0: i32, %arg1: i32) -> (i32, i32) {
    %c0_i32 = arith.constant 0 : i32
    %c0_i32_0 = arith.constant 0 : i32
    %c0_i32_1 = arith.constant 0 : i32
    return %c0_i32, %c0_i32_0 : i32, i32
  }
  func.func @transform_1(%arg0: i32, %arg1: i32) -> (i32, i32) {
    %c0_i32 = arith.constant 0 : i32
    %c0_i32_0 = arith.constant 0 : i32
    return %arg1, %c0_i32 : i32, i32
  }
  func.func @transform_2(%arg0: i32, %arg1: i32) -> (i32, i32) {
    %c0_i32 = arith.constant 0 : i32
    %c0_i32_0 = arith.constant 0 : i32
    return %arg0, %c0_i32 : i32, i32
  }
  func.func @transform_3(%arg0: i32, %arg1: i32) -> (i32, i32) {
    %c0_i32 = arith.constant 0 : i32
    %c0_i32_0 = arith.constant 0 : i32
    return %arg1, %c0_i32 : i32, i32
  }
  func.func @transform_4(%arg0: i32, %arg1: i32) -> (i32, i32) {
    %c0_i32 = arith.constant 0 : i32
    return %arg1, %arg0 : i32, i32
  }
}

</mosaic_0001>

<llo_original>
// kernel: tpu_custom_call.1
$region0: #{tpu_custom_call.1}
  #allocation0 [shape = 'u32[]', space=smem, size = 0x4, offset = 0x4, fixed_abs, tag = 'smem constant byte address 0x4 - core index']
  #allocation1 [shape = 'u32[72,128]{1,0:T(1,128)}', space=vmem, size = 0x9000, scoped, tag = 'internal scratch']
  #allocation2 [shape = 'f32[128,1]{1,0:T(8,128)}', space=vmem, size = 0x10000, scoped, tag = 'scratch operand']
  #allocation3 [shape = 'f32[1,1]{1,0:T(1,128)S(6)}', space=smem, size = 0x200, scoped, tag = 'scoped memory for tpu_custom_call.1']
  %s0 = inlined_call_operand.<no memory space> [shape: f32[1,1], index: 0, kind: input, shape index: {}]
  %s1 = inlined_call_operand.vmem [shape: f32[8,32], index: 1, kind: input, shape index: {}]
  %s2 = inlined_call_operand.vmem [shape: f32[128,32], index: 2, kind: input, shape index: {}]
  %s3 = inlined_call_operand.vmem [shape: s32[8,1], index: 3, kind: input, shape index: {}]
  %s4 = inlined_call_operand.hbm [shape: f32[8,128], index: 4, kind: output, shape index: {}]
  %s5 = sld [smem:[#allocation0]]
  $region30: #{tpu_custom_call.1} parent=0
    _
  %s7 = ssub.s32 1, %s5
  %s8 = scalar_select 0, %s7, %s5
  %9 = sst [smem:[#allocation3]] %s0
  $region1: #{tpu_custom_call.1} parent=0
    #allocation4 [shape = 'u8[4096]{0}', space=vmem, size = 0x1000, scoped, tag = 'output window, operand 0, single buffered']
    #allocation5 [shape = 's32[1]{0}', space=sflag, size = 0x4, scoped, tag = 'scoped memory for tpu_custom_call.1']
    %10 = vsyncpa [#allocation5], 0
    // Predicated region
    $region2: #{tpu_custom_call.1} parent=1 // pred_check
      _
    $region3: #{tpu_custom_call.1} parent=1 // pred_check_branch
      %12 = sbr.rel (0) target = $region5
    $region4: #{tpu_custom_call.1} parent=1 // pred_region
      _
    $region5: #{tpu_custom_call.1} parent=1 // pred_fallthru
      _
    // Predicated region
    $region6: #{tpu_custom_call.1} parent=1 // pred_check
      _
    $region7: #{tpu_custom_call.1} parent=1 // pred_check_branch
      %14 = sbr.rel (0) target = $region9
    $region8: #{tpu_custom_call.1} parent=1 // pred_region
      _
    $region9: #{tpu_custom_call.1} parent=1 // pred_fallthru
      _
    // Predicated region
    $region10: #{tpu_custom_call.1} parent=1 // pred_check
      _
    $region11: #{tpu_custom_call.1} parent=1 // pred_check_branch
      %16 = sbr.rel (0) target = $region13
    $region12: #{tpu_custom_call.1} parent=1 // pred_region
      _
    $region13: #{tpu_custom_call.1} parent=1 // pred_fallthru
      _
    // Predicated region
    $region14: #{tpu_custom_call.1} parent=1 // pred_check
      _
    $region15: #{tpu_custom_call.1} parent=1 // pred_check_branch
      %18 = sbr.rel (0) target = $region17
    $region16: #{tpu_custom_call.1} parent=1 // pred_region
      _
    $region17: #{tpu_custom_call.1} parent=1 // pred_fallthru
      _
    %p19 = scmp.eq.s32.totalorder 0, 0
    // Predicated region
    $region18: #{tpu_custom_call.1} parent=1 // pred_check
      %p20 = pneg %p19
    $region19: #{tpu_custom_call.1} parent=1 // pred_check_branch
      %22 = sbr.rel (%p20) target = $region21
    $region20: #{tpu_custom_call.1} parent=1 // pred_region
      %v23 = vld [vmem:[%s2] sm:$0xff]
      %v24 = vld [vmem:[%s2 + $0x8] sm:$0xff]
      %v25 = vld [vmem:[%s2 + $0x10] sm:$0xff]
      %v26 = vld [vmem:[%s2 + $0x18] sm:$0xff]
      %v27 = vld [vmem:[%s2 + $0x20] sm:$0xff]
      %v28 = vld [vmem:[%s2 + $0x28] sm:$0xff]
      %v29 = vld [vmem:[%s2 + $0x30] sm:$0xff]
      %v30 = vld [vmem:[%s2 + $0x38] sm:$0xff]
      %v31 = vld [vmem:[%s2 + $0x40] sm:$0xff]
      %v32 = vld [vmem:[%s2 + $0x48] sm:$0xff]
      %v33 = vld [vmem:[%s2 + $0x50] sm:$0xff]
      %v34 = vld [vmem:[%s2 + $0x58] sm:$0xff]
      %v35 = vld [vmem:[%s2 + $0x60] sm:$0xff]
      %v36 = vld [vmem:[%s2 + $0x68] sm:$0xff]
      %v37 = vld [vmem:[%s2 + $0x70] sm:$0xff]
      %v38 = vld [vmem:[%s2 + $0x78] sm:$0xff]
      %v39 = vmul.f32 %v23, %v23
      %v40 = vmul.f32 %v24, %v24
      %v41 = vmul.f32 %v25, %v25
      %v42 = vmul.f32 %v26, %v26
      %v43 = vmul.f32 %v27, %v27
      %v44 = vmul.f32 %v28, %v28
      %v45 = vmul.f32 %v29, %v29
      %v46 = vmul.f32 %v30, %v30
      %v47 = vmul.f32 %v31, %v31
      %v48 = vmul.f32 %v32, %v32
      %v49 = vmul.f32 %v33, %v33
      %v50 = vmul.f32 %v34, %v34
      %v51 = vmul.f32 %v35, %v35
      %v52 = vmul.f32 %v36, %v36
      %v53 = vmul.f32 %v37, %v37
      %v54 = vmul.f32 %v38, %v38
      %vm55 = vcmask 261120
      %v56 = vsel %vm55, %v39, 0.0
      %57 = vadd.xlane.f32.xlu0 %v56
      %v58 = vpop.xlane.xlu0 %57
      %v59 = vsel %vm55, %v40, 0.0
      %60 = vadd.xlane.f32.xlu0 %v59
      %v61 = vpop.xlane.xlu0 %60
      %v62 = vsel %vm55, %v41, 0.0
      %63 = vadd.xlane.f32.xlu0 %v62
      %v64 = vpop.xlane.xlu0 %63
      %v65 = vsel %vm55, %v42, 0.0
      %66 = vadd.xlane.f32.xlu0 %v65
      %v67 = vpop.xlane.xlu0 %66
      %v68 = vsel %vm55, %v43, 0.0
      %69 = vadd.xlane.f32.xlu0 %v68
      %v70 = vpop.xlane.xlu0 %69
      %v71 = vsel %vm55, %v44, 0.0
      %72 = vadd.xlane.f32.xlu0 %v71
      %v73 = vpop.xlane.xlu0 %72
      %v74 = vsel %vm55, %v45, 0.0
      %75 = vadd.xlane.f32.xlu0 %v74
      %v76 = vpop.xlane.xlu0 %75
      %v77 = vsel %vm55, %v46, 0.0
      %78 = vadd.xlane.f32.xlu0 %v77
      %v79 = vpop.xlane.xlu0 %78
      %v80 = vsel %vm55, %v47, 0.0
      %81 = vadd.xlane.f32.xlu0 %v80
      %v82 = vpop.xlane.xlu0 %81
      %v83 = vsel %vm55, %v48, 0.0
      %84 = vadd.xlane.f32.xlu0 %v83
      %v85 = vpop.xlane.xlu0 %84
      %v86 = vsel %vm55, %v49, 0.0
      %87 = vadd.xlane.f32.xlu0 %v86
      %v88 = vpop.xlane.xlu0 %87
      %v89 = vsel %vm55, %v50, 0.0
      %90 = vadd.xlane.f32.xlu0 %v89
      %v91 = vpop.xlane.xlu0 %90
      %v92 = vsel %vm55, %v51, 0.0
      %93 = vadd.xlane.f32.xlu0 %v92
      %v94 = vpop.xlane.xlu0 %93
      %v95 = vsel %vm55, %v52, 0.0
      %96 = vadd.xlane.f32.xlu0 %v95
      %v97 = vpop.xlane.xlu0 %96
      %v98 = vsel %vm55, %v53, 0.0
      %99 = vadd.xlane.f32.xlu0 %v98
      %v100 = vpop.xlane.xlu0 %99
      %v101 = vsel %vm55, %v54, 0.0
      %102 = vadd.xlane.f32.xlu0 %v101
      %v103 = vpop.xlane.xlu0 %102
      %v104 = vmax.f32 %v58, 1e-24
      %v105 = vmax.f32 %v61, 1e-24
      %v106 = vmax.f32 %v64, 1e-24
      %v107 = vmax.f32 %v67, 1e-24
      %v108 = vmax.f32 %v70, 1e-24
      %v109 = vmax.f32 %v73, 1e-24
      %v110 = vmax.f32 %v76, 1e-24
      %v111 = vmax.f32 %v79, 1e-24
      %v112 = vmax.f32 %v82, 1e-24
      %v113 = vmax.f32 %v85, 1e-24
      %v114 = vmax.f32 %v88, 1e-24
      %v115 = vmax.f32 %v91, 1e-24
      %v116 = vmax.f32 %v94, 1e-24
      %v117 = vmax.f32 %v97, 1e-24
      %v118 = vmax.f32 %v100, 1e-24
      %v119 = vmax.f32 %v103, 1e-24
      %v120 = vrsqrt.pop %v104
      %v121 = vmul.f32 %v120, %v104
      %v122 = vmul.f32 %v121, %v120
      %v123 = vmul.f32 0.5, %v122
      %v124 = vsub.f32 1.5, %v123
      %v125 = vmul.f32 %v120, %v124
      %vm126 = vweird.f32 %v104
      %vm127 = vweird.f32 %v120
      %vm128 = vmor %vm126, %vm127
      %v129 = vsel %vm128, %v120, %v125
      %v130 = vrsqrt.pop %v105
      %v131 = vmul.f32 %v130, %v105
      %v132 = vmul.f32 %v131, %v130
      %v133 = vmul.f32 0.5, %v132
      %v134 = vsub.f32 1.5, %v133
      %v135 = vmul.f32 %v130, %v134
      %vm136 = vweird.f32 %v105
      %vm137 = vweird.f32 %v130
      %vm138 = vmor %vm136, %vm137
      %v139 = vsel %vm138, %v130, %v135
      %v140 = vrsqrt.pop %v106
      %v141 = vmul.f32 %v140, %v106
      %v142 = vmul.f32 %v141, %v140
      %v143 = vmul.f32 0.5, %v142
      %v144 = vsub.f32 1.5, %v143
      %v145 = vmul.f32 %v140, %v144
      %vm146 = vweird.f32 %v106
      %vm147 = vweird.f32 %v140
      %vm148 = vmor %vm146, %vm147
      %v149 = vsel %vm148, %v140, %v145
      %v150 = vrsqrt.pop %v107
      %v151 = vmul.f32 %v150, %v107
      %v152 = vmul.f32 %v151, %v150
      %v153 = vmul.f32 0.5, %v152
      %v154 = vsub.f32 1.5, %v153
      %v155 = vmul.f32 %v150, %v154
      %vm156 = vweird.f32 %v107
      %vm157 = vweird.f32 %v150
      %vm158 = vmor %vm156, %vm157
      %v159 = vsel %vm158, %v150, %v155
      %v160 = vrsqrt.pop %v108
      %v161 = vmul.f32 %v160, %v108
      %v162 = vmul.f32 %v161, %v160
      %v163 = vmul.f32 0.5, %v162
      %v164 = vsub.f32 1.5, %v163
      %v165 = vmul.f32 %v160, %v164
      %vm166 = vweird.f32 %v108
      %vm167 = vweird.f32 %v160
      %vm168 = vmor %vm166, %vm167
      %v169 = vsel %vm168, %v160, %v165
      %v170 = vrsqrt.pop %v109
      %v171 = vmul.f32 %v170, %v109
      %v172 = vmul.f32 %v171, %v170
      %v173 = vmul.f32 0.5, %v172
      %v174 = vsub.f32 1.5, %v173
      %v175 = vmul.f32 %v170, %v174
      %vm176 = vweird.f32 %v109
      %vm177 = vweird.f32 %v170
      %vm178 = vmor %vm176, %vm177
      %v179 = vsel %vm178, %v170, %v175
      %v180 = vrsqrt.pop %v110
      %v181 = vmul.f32 %v180, %v110
      %v182 = vmul.f32 %v181, %v180
      %v183 = vmul.f32 0.5, %v182
      %v184 = vsub.f32 1.5, %v183
      %v185 = vmul.f32 %v180, %v184
      %vm186 = vweird.f32 %v110
      %vm187 = vweird.f32 %v180
      %vm188 = vmor %vm186, %vm187
      %v189 = vsel %vm188, %v180, %v185
      %v190 = vrsqrt.pop %v111
      %v191 = vmul.f32 %v190, %v111
      %v192 = vmul.f32 %v191, %v190
      %v193 = vmul.f32 0.5, %v192
      %v194 = vsub.f32 1.5, %v193
      %v195 = vmul.f32 %v190, %v194
      %vm196 = vweird.f32 %v111
      %vm197 = vweird.f32 %v190
      %vm198 = vmor %vm196, %vm197
      %v199 = vsel %vm198, %v190, %v195
      %v200 = vrsqrt.pop %v112
      %v201 = vmul.f32 %v200, %v112
      %v202 = vmul.f32 %v201, %v200
      %v203 = vmul.f32 0.5, %v202
      %v204 = vsub.f32 1.5, %v203
      %v205 = vmul.f32 %v200, %v204
      %vm206 = vweird.f32 %v112
      %vm207 = vweird.f32 %v200
      %vm208 = vmor %vm206, %vm207
      %v209 = vsel %vm208, %v200, %v205
      %v210 = vrsqrt.pop %v113
      %v211 = vmul.f32 %v210, %v113
      %v212 = vmul.f32 %v211, %v210
      %v213 = vmul.f32 0.5, %v212
      %v214 = vsub.f32 1.5, %v213
      %v215 = vmul.f32 %v210, %v214
      %vm216 = vweird.f32 %v113
      %vm217 = vweird.f32 %v210
      %vm218 = vmor %vm216, %vm217
      %v219 = vsel %vm218, %v210, %v215
      %v220 = vrsqrt.pop %v114
      %v221 = vmul.f32 %v220, %v114
      %v222 = vmul.f32 %v221, %v220
      %v223 = vmul.f32 0.5, %v222
      %v224 = vsub.f32 1.5, %v223
      %v225 = vmul.f32 %v220, %v224
      %vm226 = vweird.f32 %v114
      %vm227 = vweird.f32 %v220
      %vm228 = vmor %vm226, %vm227
      %v229 = vsel %vm228, %v220, %v225
      %v230 = vrsqrt.pop %v115
      %v231 = vmul.f32 %v230, %v115
      %v232 = vmul.f32 %v231, %v230
      %v233 = vmul.f32 0.5, %v232
      %v234 = vsub.f32 1.5, %v233
      %v235 = vmul.f32 %v230, %v234
      %vm236 = vweird.f32 %v115
      %vm237 = vweird.f32 %v230
      %vm238 = vmor %vm236, %vm237
      %v239 = vsel %vm238, %v230, %v235
      %v240 = vrsqrt.pop %v116
      %v241 = vmul.f32 %v240, %v116
      %v242 = vmul.f32 %v241, %v240
      %v243 = vmul.f32 0.5, %v242
      %v244 = vsub.f32 1.5, %v243
      %v245 = vmul.f32 %v240, %v244
      %vm246 = vweird.f32 %v116
      %vm247 = vweird.f32 %v240
      %vm248 = vmor %vm246, %vm247
      %v249 = vsel %vm248, %v240, %v245
      %v250 = vrsqrt.pop %v117
      %v251 = vmul.f32 %v250, %v117
      %v252 = vmul.f32 %v251, %v250
      %v253 = vmul.f32 0.5, %v252
      %v254 = vsub.f32 1.5, %v253
      %v255 = vmul.f32 %v250, %v254
      %vm256 = vweird.f32 %v117
      %vm257 = vweird.f32 %v250
      %vm258 = vmor %vm256, %vm257
      %v259 = vsel %vm258, %v250, %v255
      %v260 = vrsqrt.pop %v118
      %v261 = vmul.f32 %v260, %v118
      %v262 = vmul.f32 %v261, %v260
      %v263 = vmul.f32 0.5, %v262
      %v264 = vsub.f32 1.5, %v263
      %v265 = vmul.f32 %v260, %v264
      %vm266 = vweird.f32 %v118
      %vm267 = vweird.f32 %v260
      %vm268 = vmor %vm266, %vm267
      %v269 = vsel %vm268, %v260, %v265
      %v270 = vrsqrt.pop %v119
      %v271 = vmul.f32 %v270, %v119
      %v272 = vmul.f32 %v271, %v270
      %v273 = vmul.f32 0.5, %v272
      %v274 = vsub.f32 1.5, %v273
      %v275 = vmul.f32 %v270, %v274
      %vm276 = vweird.f32 %v119
      %vm277 = vweird.f32 %v270
      %vm278 = vmor %vm276, %vm277
      %v279 = vsel %vm278, %v270, %v275
      %vm280 = vcmask 7168
      %281 = vst.msk [vmem:[#allocation2] sm:$0xff] %vm280, %v129
      %282 = vst.msk [vmem:[#allocation2 + $0x8] sm:$0xff] %vm280, %v139
      %283 = vst.msk [vmem:[#allocation2 + $0x10] sm:$0xff] %vm280, %v149
      %284 = vst.msk [vmem:[#allocation2 + $0x18] sm:$0xff] %vm280, %v159
      %285 = vst.msk [vmem:[#allocation2 + $0x20] sm:$0xff] %vm280, %v169
      %286 = vst.msk [vmem:[#allocation2 + $0x28] sm:$0xff] %vm280, %v179
      %287 = vst.msk [vmem:[#allocation2 + $0x30] sm:$0xff] %vm280, %v189
      %288 = vst.msk [vmem:[#allocation2 + $0x38] sm:$0xff] %vm280, %v199
      %289 = vst.msk [vmem:[#allocation2 + $0x40] sm:$0xff] %vm280, %v209
      %290 = vst.msk [vmem:[#allocation2 + $0x48] sm:$0xff] %vm280, %v219
      %291 = vst.msk [vmem:[#allocation2 + $0x50] sm:$0xff] %vm280, %v229
      %292 = vst.msk [vmem:[#allocation2 + $0x58] sm:$0xff] %vm280, %v239
      %293 = vst.msk [vmem:[#allocation2 + $0x60] sm:$0xff] %vm280, %v249
      %294 = vst.msk [vmem:[#allocation2 + $0x68] sm:$0xff] %vm280, %v259
      %295 = vst.msk [vmem:[#allocation2 + $0x70] sm:$0xff] %vm280, %v269
      %296 = vst.msk [vmem:[#allocation2 + $0x78] sm:$0xff] %vm280, %v279
    $region21: #{tpu_custom_call.1} parent=1 // pred_fallthru
      _
    %s297 = sld [smem:[#allocation3]]
    %v298 = vld [vmem:[%s1] sm:$0xff]
    %v299 = vld [vmem:[%s2] sm:$0xff]
    %v300 = vld [vmem:[%s2 + $0x8] sm:$0xff]
    %v301 = vld [vmem:[%s2 + $0x10] sm:$0xff]
    %v302 = vld [vmem:[%s2 + $0x18] sm:$0xff]
    %v303 = vld [vmem:[%s2 + $0x20] sm:$0xff]
    %v304 = vld [vmem:[%s2 + $0x28] sm:$0xff]
    %v305 = vld [vmem:[%s2 + $0x30] sm:$0xff]
    %v306 = vld [vmem:[%s2 + $0x38] sm:$0xff]
    %v307 = vld [vmem:[%s2 + $0x40] sm:$0xff]
    %v308 = vld [vmem:[%s2 + $0x48] sm:$0xff]
    %v309 = vld [vmem:[%s2 + $0x50] sm:$0xff]
    %v310 = vld [vmem:[%s2 + $0x58] sm:$0xff]
    %v311 = vld [vmem:[%s2 + $0x60] sm:$0xff]
    %v312 = vld [vmem:[%s2 + $0x68] sm:$0xff]
    %v313 = vld [vmem:[%s2 + $0x70] sm:$0xff]
    %v314 = vld [vmem:[%s2 + $0x78] sm:$0xff]
    %v315 = vld [vmem:[%s3] sm:$0xff]
    %v316 = vmul.f32 %v298, %v298
    %vm317 = vcmask 261120
    %v318 = vsel %vm317, %v316, 0.0
    %319 = vadd.xlane.f32.xlu0 %v318
    %v320 = vpop.xlane.xlu0 %319
    %v321 = vrsqrt.pop %v320
    %v322 = vmul.f32 %v321, %v320
    %v323 = vmul.f32 %v322, %v321
    %v324 = vmul.f32 0.5, %v323
    %v325 = vsub.f32 1.5, %v324
    %v326 = vmul.f32 %v321, %v325
    %v327 = vmul.f32 %v320, %v326
    %vm328 = vcmp.eq.f32.partialorder %v320, inf
    %v329 = vsel %vm328, %v320, %v327
    %vm330 = vcmp.eq.f32.partialorder %v320, 0.0
    %v331 = vand.u32 %v320, 2147483648
    %v332 = vsel %vm330, %v331, %v329
    %v333 = vmax.f32 %v320, 1e-24
    %v334 = vrsqrt.pop %v333
    %v335 = vmul.f32 %v334, %v333
    %v336 = vmul.f32 %v335, %v334
    %v337 = vmul.f32 0.5, %v336
    %v338 = vsub.f32 1.5, %v337
    %v339 = vmul.f32 %v334, %v338
    %vm340 = vweird.f32 %v333
    %vm341 = vweird.f32 %v334
    %vm342 = vmor %vm340, %vm341
    %v343 = vsel %vm342, %v334, %v339
    %v344 = vld [vmem:[#allocation2] sm:$0xff]
    %v345 = vld [vmem:[#allocation2 + $0x8] sm:$0xff]
    %v346 = vld [vmem:[#allocation2 + $0x10] sm:$0xff]
    %v347 = vld [vmem:[#allocation2 + $0x18] sm:$0xff]
    %v348 = vld [vmem:[#allocation2 + $0x20] sm:$0xff]
    %v349 = vld [vmem:[#allocation2 + $0x28] sm:$0xff]
    %v350 = vld [vmem:[#allocation2 + $0x30] sm:$0xff]
    %v351 = vld [vmem:[#allocation2 + $0x38] sm:$0xff]
    %v352 = vld [vmem:[#allocation2 + $0x40] sm:$0xff]
    %v353 = vld [vmem:[#allocation2 + $0x48] sm:$0xff]
    %v354 = vld [vmem:[#allocation2 + $0x50] sm:$0xff]
    %v355 = vld [vmem:[#allocation2 + $0x58] sm:$0xff]
    %v356 = vld [vmem:[#allocation2 + $0x60] sm:$0xff]
    %v357 = vld [vmem:[#allocation2 + $0x68] sm:$0xff]
    %v358 = vld [vmem:[#allocation2 + $0x70] sm:$0xff]
    %v359 = vld [vmem:[#allocation2 + $0x78] sm:$0xff]
    %v361 = vsel %vm317, %v298, 0
    %v364 = vsel %vm317, %v299, 0
    %v367 = vsel %vm317, %v300, 0
    %v370 = vsel %vm317, %v301, 0
    %v373 = vsel %vm317, %v302, 0
    %v376 = vsel %vm317, %v303, 0
    %v379 = vsel %vm317, %v304, 0
    %v382 = vsel %vm317, %v305, 0
    %v385 = vsel %vm317, %v306, 0
    %v388 = vsel %vm317, %v307, 0
    %v391 = vsel %vm317, %v308, 0
    %v394 = vsel %vm317, %v309, 0
    %v397 = vsel %vm317, %v310, 0
    %v400 = vsel %vm317, %v311, 0
    %v403 = vsel %vm317, %v312, 0
    %v406 = vsel %vm317, %v313, 0
    %v409 = vsel %vm317, %v314, 0
    %411 = vmatpush.xpose.msra.mxu0 %v409
    %412 = vmatpush.xpose.msra.mxu0 %v406
    %413 = vmatpush.xpose.msra.mxu0 %v403
    %414 = vmatpush.xpose.msra.mxu0 %v400
    %415 = vmatpush.xpose.msra.mxu0 %v397
    %416 = vmatpush.xpose.msra.mxu0 %v394
    %417 = vmatpush.xpose.msra.mxu0 %v391
    %418 = vmatpush.xpose.msra.mxu0 %v388
    %419 = vmatpush.xpose.msra.mxu0 %v385
    %420 = vmatpush.xpose.msra.mxu0 %v382
    %421 = vmatpush.xpose.msra.mxu0 %v379
    %422 = vmatpush.xpose.msra.mxu0 %v376
    %423 = vmatpush.xpose.msra.mxu0 %v373
    %424 = vmatpush.xpose.msra.mxu0 %v370
    %425 = vmatpush.xpose.msra.mxu0 %v367
    %426 = vmatpush.xpose.msra.mxu0 %v364
    %427 = vmatmul.f32.gmra.mxu0 %v361
    %v428 = vpop.f32.mrf.mxu0
    %v429 = vadd.f32 0.0, %v428
    %430 = vdwg.mxu0
    %v431 = vmul.f32 %v429, %v343
    %432 = vxpose.xlu0.b32.start [1/16] %v344, 128
    %433 = vxpose.xlu0.b32.cont [2/16] %v345, 128
    %434 = vxpose.xlu0.b32.cont [3/16] %v346, 128
    %435 = vxpose.xlu0.b32.cont [4/16] %v347, 128
    %436 = vxpose.xlu0.b32.cont [5/16] %v348, 128
    %437 = vxpose.xlu0.b32.cont [6/16] %v349, 128
    %438 = vxpose.xlu0.b32.cont [7/16] %v350, 128
    %439 = vxpose.xlu0.b32.cont [8/16] %v351, 128
    %440 = vxpose.xlu0.b32.cont [9/16] %v352, 128
    %441 = vxpose.xlu0.b32.cont [10/16] %v353, 128
    %442 = vxpose.xlu0.b32.cont [11/16] %v354, 128
    %443 = vxpose.xlu0.b32.cont [12/16] %v355, 128
    %444 = vxpose.xlu0.b32.cont [13/16] %v356, 128
    %445 = vxpose.xlu0.b32.cont [14/16] %v357, 128
    %446 = vxpose.xlu0.b32.cont [15/16] %v358, 128
    %447 = vxpose.xlu0.b32.end [16/16] %v359, 128
    %v448 = vpop.trf.xlu0
    %v449 = vpop.trf.xlu0
    %v450 = vpop.trf.xlu0
    %v451 = vpop.trf.xlu0
    %v452 = vpop.trf.xlu0
    %v453 = vpop.trf.xlu0
    %v454 = vpop.trf.xlu0
    %v455 = vpop.trf.xlu0
    %v456 = vpop.trf.xlu0
    %v457 = vpop.trf.xlu0
    %v458 = vpop.trf.xlu0
    %v459 = vpop.trf.xlu0
    %v460 = vpop.trf.xlu0
    %v461 = vpop.trf.xlu0
    %v462 = vpop.trf.xlu0
    %v463 = vpop.trf.xlu0
    %v464 = vperm.slane %v448, 0
    %v465 = vmul.f32 %v431, %v464
    %v466 = vmax.f32 %v465, -1.0
    %v467 = vmin.f32 %v466, 1.0
    %v468 = vmul.f32 %v467, %v467
    %v469 = vmul.f32 %v468, 8.0
    %v470 = vmul.f32 %v469, %v468
    %v471 = vsub.f32 %v470, %v469
    %v472 = vadd.f32 %v471, 1.0
    %vm473 = vcmp.lt.f32.partialorder %v467, 0.70710677
    %vm474 = vcmp.lt.f32.partialorder %v467, 1.7948966e-09
    %vm475 = vcmp.lt.f32.partialorder %v467, -0.70710677
    %v476 = vsel %vm473, 1, 0
    %v477 = vcvt.s32.f32 %v476
    %v478 = vsel %vm474, 1, 0
    %v479 = vcvt.s32.f32 %v478
    %v480 = vadd.f32 %v477, %v479
    %v481 = vsel %vm475, 1, 0
    %v482 = vcvt.s32.f32 %v481
    %v483 = vadd.f32 %v480, %v482
    %vm484 = vmxor %vm473, %vm474
    %vm485 = vmxor %vm484, %vm475
    %v486 = vsel %vm485, -1.0, 1.0
    %v487 = vmul.f32 %v486, %v472
    %v488 = vmul.f32 %v483, 2.0
    %v489 = vsub.f32 %v487, %v488
    %s490 = smul.u32 0, 128
    %v491 = vlaneseq
    %v492 = vand.u32 %v491, 127
    %v493 = vstv %s490
    %v494 = vadd.s32 %v492, %v493
    %495 = vset.pattern.permute.xlu0 0
    %496 = vperm.xlu0 %495, %v315
    %v497 = vpop.permute.xlu0 %496
    %vm498 = vcmp.eq.s32.totalorder %v494, %v497
    %v499 = vsel %vm498, 1, 0
    %v500 = vcvt.s32.f32 %v499
    %v501 = vsub.f32 %v489, %v467
    %v502 = vmul.f32 %v500, %v501
    %v503 = vstv %s297
    %v504 = vmul.f32 %v502, %v503
    %v505 = vadd.f32 %v504, %v467
    %v506 = vmul.f32 %v505, %v332
    %507 = vst [vmem:[#allocation4] sm:$0xff] %v506
    // Predicated region
    $region22: #{tpu_custom_call.1} parent=1 // pred_check
      _
    $region23: #{tpu_custom_call.1} parent=1 // pred_check_branch
      %509 = sbr.rel (0) target = $region25
    $region24: #{tpu_custom_call.1} parent=1 // pred_region
      %511 = vsyncadd [#allocation5], 0
      %s513 = sshll.u32 [#allocation4], 4
      %s514 = int_to_ptr.vmem [resolvable:$true] %s513
      %s515 = sshll.u32 %s4, 4
      %s516 = int_to_ptr.hbm [resolvable:$true] %s515
      %518 = dma.vmem_to_hbm [thread:$0]  %s514, 128, %s516, [#allocation5]
    $region25: #{tpu_custom_call.1} parent=1 // pred_fallthru
      _
    // Predicated region
    $region26: #{tpu_custom_call.1} parent=1 // pred_check
      _
    $region27: #{tpu_custom_call.1} parent=1 // pred_check_branch
      %520 = sbr.rel (0) target = $region29
    $region28: #{tpu_custom_call.1} parent=1 // pred_region
      %522 = dma.done [#allocation5], 128
    $region29: #{tpu_custom_call.1} parent=1 // pred_fallthru
      _
    %523 = vsyncpa [#allocation5], 1

</llo_original>
